<compile_context>
chip_gen: v5e
topology: v5e:2x2
jax: 0.10.0
libtpu: 0.0.40
codegen_flags: <defaults>
</compile_context>

<pallas_src>
import functools

import jax
import jax.numpy as jnp
from jax import lax
from jax.experimental import pallas as pl
from jax.experimental.pallas import tpu as pltpu

LANE = 128      # vreg lane width (last dim)
SUBLANE = 8     # vreg sublane width (second-to-last dim)


def _round_up(x, m):
    return ((x + m - 1) // m) * m


def rnn_fused_kernel(tok_ref, w_ref, b_fc_ref, out_ref):
    """Fused embedding + RNN recurrence + final Linear, single invocation.

    tok_ref : (T*Bp, 1)          int32  time-major token ids, batch padded to Bp
    w_ref   : (Rp, 2*Hp + Cp)    bf16   [ emb@W_ih + b_rnn | W_hh^T | W_fc^T ]  (zero-padded)
    b_fc_ref: (1, Cp)            f32
    out_ref : (Bp, Cp)           f32    lane-dense logits (valid region [:B, :3])
    """
    TB = tok_ref.shape[0]
    Bp, Cp = out_ref.shape
    Rp, wtot = w_ref.shape
    Hp = (wtot - Cp) // 2
    T = TB // Bp

    # ---- static slices out of the single weight slab (all at 128-lane boundaries) ----------
    emb_proj = w_ref[:, 0:Hp]                  # (Rp, Hp)  = embedding @ W_ih + b_rnn (padded)
    w_hh = w_ref[0:Hp, Hp:2 * Hp]              # (Hp, Hp)
    w_fc = w_ref[0:Hp, 2 * Hp:2 * Hp + Cp]     # (Hp, Cp)

    # ---- in-kernel embedding lookup as a one-hot MXU matmul --------------------------------
    # vocab is tiny (padded to Rp=128 lanes); one-hot rows select exactly one table row, so
    # this is bit-equivalent to gather-then-project (bias folded into the table rows).
    tok = tok_ref[...]                                                   # (TB, 1) int32
    iota = lax.broadcasted_iota(jnp.int32, (TB, Rp), 1)                  # (TB, Rp)
    onehot = jnp.where(iota == tok, 1.0, 0.0).astype(jnp.bfloat16)       # exact 0/1 in bf16

    # Hoisted input projection: ONE MXU call, result kept as a value (8 vregs), no VMEM scratch.
    z = jnp.dot(onehot, emb_proj, preferred_element_type=jnp.float32)    # (TB, Hp) f32

    # ---- serial recurrence: one small matmul per step, fully unrolled ----------------------
    # Zero-padded hidden columns/rows keep the padded lanes exactly tanh(0)=0 forever.
    h = jnp.zeros((Bp, Hp), dtype=jnp.float32)
    for t in range(T):                               # Bp is a multiple of 8 -> vreg-aligned slice
        z_t = z[t * Bp:(t + 1) * Bp, :]              # (Bp, Hp), static slice
        h = jnp.tanh(z_t + jnp.dot(h.astype(jnp.bfloat16), w_hh,
                                   preferred_element_type=jnp.float32))

    # ---- final Linear, lane-dense output store ----------------------------------------------
    out_ref[...] = (
        jnp.dot(h.astype(jnp.bfloat16), w_fc, preferred_element_type=jnp.float32)
        + b_fc_ref[...]
    )


def pad_params(params):
    """Pre-combine and zero-pad all parameters once, outside the hot path.

    Produces one bf16 weight slab  [ emb@W_ih + b_rnn | W_hh^T | W_fc^T ]  and an f32 fc bias.
    """
    V, E = params["embedding"].shape
    H = params["w_hh_t"].shape[0]
    C = params["w_fc_t"].shape[1]
    Vp, Hp, Cp = _round_up(V, LANE), _round_up(H, LANE), _round_up(C, LANE)
    Rp = max(Vp, Hp)   # common row count of the slab

    # Fuse Embedding + input projection + rnn bias: onehot(x) @ (emb @ W_ih + b) == emb[x] @ W_ih + b
    emb_proj = params["embedding"] @ params["w_ih_t"] + params["b"]      # (V, H) f32
    emb_proj = jnp.pad(emb_proj, ((0, Rp - V), (0, Hp - H)))
    w_hh = jnp.pad(params["w_hh_t"], ((0, Rp - H), (0, Hp - H)))
    w_fc = jnp.pad(params["w_fc_t"], ((0, Rp - H), (0, Cp - C)))

    w_all = jnp.concatenate([emb_proj, w_hh, w_fc], axis=1).astype(jnp.bfloat16)  # (Rp, 2Hp+Cp)
    b_fc = jnp.pad(params["b_fc"], ((0, 0), (0, Cp - C))).astype(jnp.float32)     # (1, Cp)
    return {"w_all": w_all, "b_fc": b_fc}


@functools.partial(jax.jit, static_argnames=("num_classes",))
def torch_rnn_forward(x_tokens, padded_params, num_classes=3):
    """x_tokens: int32 (B, T) token ids. Returns logits (B, num_classes) float32."""
    B, T = x_tokens.shape
    Bp = _round_up(B, SUBLANE)
    Cp = padded_params["b_fc"].shape[1]

    # Tokens only: tiny transpose/pad of a (B,T) int array (no f32 activation round trip).
    tok = jnp.pad(x_tokens.T, ((0, 0), (0, Bp - B)))                # (T, Bp) time-major
    tok = tok.reshape(T * Bp, 1).astype(jnp.int32)                  # (T*Bp, 1)

    vmem = pl.BlockSpec(memory_space=pltpu.MemorySpace.VMEM)
    out_padded = pl.pallas_call(
        rnn_fused_kernel,
        out_shape=jax.ShapeDtypeStruct((Bp, Cp), jnp.float32),
        in_specs=[vmem, vmem, vmem],
        out_specs=vmem,
    )(tok, padded_params["w_all"], padded_params["b_fc"])
    return out_padded[:B, :num_classes]


def reference_forward(x_tokens, params):
    """Pure-JAX f32 reference mirroring the PyTorch forward (unpadded)."""
    emb = jnp.take(params["embedding"], x_tokens, axis=0)  # (B, T, E)
    B, T, _ = emb.shape
    H = params["w_hh_t"].shape[0]
    h = jnp.zeros((B, H), jnp.float32)
    for t in range(T):
        h = jnp.tanh(emb[:, t, :] @ params["w_ih_t"] + h @ params["w_hh_t"] + params["b"])
    return h @ params["w_fc_t"] + params["b_fc"]


def make_params(vocab_size, embedding_dim, hidden_dim, num_classes=3, seed=0):
    keys = jax.random.split(jax.random.PRNGKey(seed), 6)
    scale = 0.1
    emb = scale * jax.random.normal(keys[0], (vocab_size, embedding_dim), jnp.float32)
    w_ih_t = scale * jax.random.normal(keys[1], (embedding_dim, hidden_dim), jnp.float32)
    w_hh_t = scale * jax.random.normal(keys[2], (hidden_dim, hidden_dim), jnp.float32)
    b_ih = scale * jax.random.normal(keys[3], (1, hidden_dim), jnp.float32)
    b_hh = scale * jax.random.normal(keys[4], (1, hidden_dim), jnp.float32)
    w_fc_t = scale * jax.random.normal(keys[5], (hidden_dim, num_classes), jnp.float32)
    b_fc = jnp.zeros((1, num_classes), jnp.float32)
    return {
        "embedding": emb,
        "w_ih_t": w_ih_t,
        "w_hh_t": w_hh_t,
        "b": b_ih + b_hh,   # PyTorch adds both RNN biases; combine once
        "w_fc_t": w_fc_t,
        "b_fc": b_fc,
    }


if __name__ == "__main__":
    # Small shapes consistent with the module's forward:
    #   x: (batch=2, seq=8) int token ids, vocab(input_size)=16,
    #   embedding_dim=32, hidden_dim=32, num_classes=3.
    B, T = 2, 8
    VOCAB, E, H, C = 16, 32, 32, 3

    params = make_params(VOCAB, E, H, num_classes=C, seed=0)
    padded_params = pad_params(params)
    x = jax.random.randint(jax.random.PRNGKey(0), (B, T), 0, VOCAB, dtype=jnp.int32)

    logits = torch_rnn_forward(x, padded_params, num_classes=C)
    logits = jax.block_until_ready(logits)

    ref = reference_forward(x, params)
    assert logits.shape == (B, C)
    # bf16 MXU operands (per perf review) -> relaxed tolerance vs the f32 reference.
    assert jnp.allclose(logits, ref, atol=2e-2, rtol=2e-2), (logits, ref)

    print("KERNEL_OK")
</pallas_src>

<mosaic_0001>
module attributes {stable_mosaic.version = 11 : i64} {
  func.func @rnn_fused_kernel(%arg0: memref<64x1xi32, #tpu.memory_space<vmem>>, %arg1: memref<128x384xbf16, #tpu.memory_space<vmem>>, %arg2: memref<1x128xf32, #tpu.memory_space<vmem>>, %arg3: memref<8x128xf32, #tpu.memory_space<vmem>>) attributes {dimension_semantics = [], scalar_prefetch = 0 : i64, scratch_operands = 0 : i64, tpu.core_type = #tpu.core_type<tc>} {
    %c0 = arith.constant 0 : index
    %c0_0 = arith.constant 0 : index
    %0 = vector.load %arg1[%c0, %c0_0] : memref<128x384xbf16, #tpu.memory_space<vmem>>, vector<128x128xbf16>
    %c0_1 = arith.constant 0 : index
    %c128 = arith.constant 128 : index
    %1 = vector.load %arg1[%c0_1, %c128] : memref<128x384xbf16, #tpu.memory_space<vmem>>, vector<128x128xbf16>
    %c0_2 = arith.constant 0 : index
    %c256 = arith.constant 256 : index
    %2 = vector.load %arg1[%c0_2, %c256] : memref<128x384xbf16, #tpu.memory_space<vmem>>, vector<128x128xbf16>
    %c0_3 = arith.constant 0 : index
    %c0_4 = arith.constant 0 : index
    %3 = vector.load %arg0[%c0_3, %c0_4] : memref<64x1xi32, #tpu.memory_space<vmem>>, vector<64x1xi32>
    %4 = tpu.iota {dimensions = array<i32: 1>} : vector<64x128xi32>
    %5 = vector.broadcast %3 : vector<64x1xi32> to vector<64x128xi32>
    %6 = arith.cmpi eq, %4, %5 : vector<64x128xi32>
    %cst = arith.constant 1.000000e+00 : f32
    %cst_5 = arith.constant 0.000000e+00 : f32
    %7 = vector.broadcast %cst : f32 to vector<64x128xf32>
    %8 = vector.broadcast %cst_5 : f32 to vector<64x128xf32>
    %9 = arith.select %6, %7, %8 : vector<64x128xi1>, vector<64x128xf32>
    %10 = arith.truncf %9 : vector<64x128xf32> to vector<64x128xbf16>
    %cst_6 = arith.constant dense<0.000000e+00> : vector<64x128xf32>
    %11 = tpu.matmul %10, %0, %cst_6 {dimension_numbers = #tpu.dot_dimension_numbers<[1], [0], [0], [1], [0, 0, 1, 1], [], []>} : vector<64x128xbf16>, vector<128x128xbf16>, vector<64x128xf32> -> vector<64x128xf32>
    %cst_7 = arith.constant 0.000000e+00 : f32
    %12 = vector.broadcast %cst_7 : f32 to vector<8x128xf32>
    %13 = vector.extract_strided_slice %11 {offsets = [0, 0], sizes = [8, 128], strides = [1, 1]} : vector<64x128xf32> to vector<8x128xf32>
    %14 = arith.truncf %12 : vector<8x128xf32> to vector<8x128xbf16>
    %cst_8 = arith.constant dense<0.000000e+00> : vector<8x128xf32>
    %15 = tpu.matmul %14, %1, %cst_8 {dimension_numbers = #tpu.dot_dimension_numbers<[1], [0], [0], [1], [0, 0, 1, 1], [], []>} : vector<8x128xbf16>, vector<128x128xbf16>, vector<8x128xf32> -> vector<8x128xf32>
    %16 = arith.addf %13, %15 : vector<8x128xf32>
    %17 = math.tanh %16 : vector<8x128xf32>
    %18 = vector.extract_strided_slice %11 {offsets = [8, 0], sizes = [8, 128], strides = [1, 1]} : vector<64x128xf32> to vector<8x128xf32>
    %19 = arith.truncf %17 : vector<8x128xf32> to vector<8x128xbf16>
    %cst_9 = arith.constant dense<0.000000e+00> : vector<8x128xf32>
    %20 = tpu.matmul %19, %1, %cst_9 {dimension_numbers = #tpu.dot_dimension_numbers<[1], [0], [0], [1], [0, 0, 1, 1], [], []>} : vector<8x128xbf16>, vector<128x128xbf16>, vector<8x128xf32> -> vector<8x128xf32>
    %21 = arith.addf %18, %20 : vector<8x128xf32>
    %22 = math.tanh %21 : vector<8x128xf32>
    %23 = vector.extract_strided_slice %11 {offsets = [16, 0], sizes = [8, 128], strides = [1, 1]} : vector<64x128xf32> to vector<8x128xf32>
    %24 = arith.truncf %22 : vector<8x128xf32> to vector<8x128xbf16>
    %cst_10 = arith.constant dense<0.000000e+00> : vector<8x128xf32>
    %25 = tpu.matmul %24, %1, %cst_10 {dimension_numbers = #tpu.dot_dimension_numbers<[1], [0], [0], [1], [0, 0, 1, 1], [], []>} : vector<8x128xbf16>, vector<128x128xbf16>, vector<8x128xf32> -> vector<8x128xf32>
    %26 = arith.addf %23, %25 : vector<8x128xf32>
    %27 = math.tanh %26 : vector<8x128xf32>
    %28 = vector.extract_strided_slice %11 {offsets = [24, 0], sizes = [8, 128], strides = [1, 1]} : vector<64x128xf32> to vector<8x128xf32>
    %29 = arith.truncf %27 : vector<8x128xf32> to vector<8x128xbf16>
    %cst_11 = arith.constant dense<0.000000e+00> : vector<8x128xf32>
    %30 = tpu.matmul %29, %1, %cst_11 {dimension_numbers = #tpu.dot_dimension_numbers<[1], [0], [0], [1], [0, 0, 1, 1], [], []>} : vector<8x128xbf16>, vector<128x128xbf16>, vector<8x128xf32> -> vector<8x128xf32>
    %31 = arith.addf %28, %30 : vector<8x128xf32>
    %32 = math.tanh %31 : vector<8x128xf32>
    %33 = vector.extract_strided_slice %11 {offsets = [32, 0], sizes = [8, 128], strides = [1, 1]} : vector<64x128xf32> to vector<8x128xf32>
    %34 = arith.truncf %32 : vector<8x128xf32> to vector<8x128xbf16>
    %cst_12 = arith.constant dense<0.000000e+00> : vector<8x128xf32>
    %35 = tpu.matmul %34, %1, %cst_12 {dimension_numbers = #tpu.dot_dimension_numbers<[1], [0], [0], [1], [0, 0, 1, 1], [], []>} : vector<8x128xbf16>, vector<128x128xbf16>, vector<8x128xf32> -> vector<8x128xf32>
    %36 = arith.addf %33, %35 : vector<8x128xf32>
    %37 = math.tanh %36 : vector<8x128xf32>
    %38 = vector.extract_strided_slice %11 {offsets = [40, 0], sizes = [8, 128], strides = [1, 1]} : vector<64x128xf32> to vector<8x128xf32>
    %39 = arith.truncf %37 : vector<8x128xf32> to vector<8x128xbf16>
    %cst_13 = arith.constant dense<0.000000e+00> : vector<8x128xf32>
    %40 = tpu.matmul %39, %1, %cst_13 {dimension_numbers = #tpu.dot_dimension_numbers<[1], [0], [0], [1], [0, 0, 1, 1], [], []>} : vector<8x128xbf16>, vector<128x128xbf16>, vector<8x128xf32> -> vector<8x128xf32>
    %41 = arith.addf %38, %40 : vector<8x128xf32>
    %42 = math.tanh %41 : vector<8x128xf32>
    %43 = vector.extract_strided_slice %11 {offsets = [48, 0], sizes = [8, 128], strides = [1, 1]} : vector<64x128xf32> to vector<8x128xf32>
    %44 = arith.truncf %42 : vector<8x128xf32> to vector<8x128xbf16>
    %cst_14 = arith.constant dense<0.000000e+00> : vector<8x128xf32>
    %45 = tpu.matmul %44, %1, %cst_14 {dimension_numbers = #tpu.dot_dimension_numbers<[1], [0], [0], [1], [0, 0, 1, 1], [], []>} : vector<8x128xbf16>, vector<128x128xbf16>, vector<8x128xf32> -> vector<8x128xf32>
    %46 = arith.addf %43, %45 : vector<8x128xf32>
    %47 = math.tanh %46 : vector<8x128xf32>
    %48 = vector.extract_strided_slice %11 {offsets = [56, 0], sizes = [8, 128], strides = [1, 1]} : vector<64x128xf32> to vector<8x128xf32>
    %49 = arith.truncf %47 : vector<8x128xf32> to vector<8x128xbf16>
    %cst_15 = arith.constant dense<0.000000e+00> : vector<8x128xf32>
    %50 = tpu.matmul %49, %1, %cst_15 {dimension_numbers = #tpu.dot_dimension_numbers<[1], [0], [0], [1], [0, 0, 1, 1], [], []>} : vector<8x128xbf16>, vector<128x128xbf16>, vector<8x128xf32> -> vector<8x128xf32>
    %51 = arith.addf %48, %50 : vector<8x128xf32>
    %52 = math.tanh %51 : vector<8x128xf32>
    %53 = arith.truncf %52 : vector<8x128xf32> to vector<8x128xbf16>
    %cst_16 = arith.constant dense<0.000000e+00> : vector<8x128xf32>
    %54 = tpu.matmul %53, %2, %cst_16 {dimension_numbers = #tpu.dot_dimension_numbers<[1], [0], [0], [1], [0, 0, 1, 1], [], []>} : vector<8x128xbf16>, vector<128x128xbf16>, vector<8x128xf32> -> vector<8x128xf32>
    %c0_17 = arith.constant 0 : index
    %c0_18 = arith.constant 0 : index
    %55 = vector.load %arg2[%c0_17, %c0_18] : memref<1x128xf32, #tpu.memory_space<vmem>>, vector<1x128xf32>
    %56 = vector.broadcast %55 : vector<1x128xf32> to vector<8x128xf32>
    %57 = arith.addf %54, %56 : vector<8x128xf32>
    %c0_19 = arith.constant 0 : index
    %c0_20 = arith.constant 0 : index
    %58 = vector.load %arg3[%c0_19, %c0_20] : memref<8x128xf32, #tpu.memory_space<vmem>>, vector<8x128xf32>
    tpu.vector_store %arg3[%c0_19, %c0_20], %57 {strides = array<i32>} : memref<8x128xf32, #tpu.memory_space<vmem>>, vector<8x128xf32>,
    return
  }
}

</mosaic_0001>

<llo_original>
// kernel: torch_rnn_forward.1
$region0: #{torch_rnn_forward.1}
  #allocation0 [shape = 'u32[]', space=smem, size = 0x4, offset = 0x4, fixed_abs, tag = 'smem constant byte address 0x4 - core index']
  #allocation1 [shape = 'u32[72,128]{1,0:T(1,128)}', space=vmem, size = 0x9000, scoped, tag = 'internal scratch']
  %s0 = inlined_call_operand.vmem [shape: s32[64,1], index: 0, kind: input, shape index: {}]
  %s1 = inlined_call_operand.hbm [shape: bf16[128,384], index: 1, kind: input, shape index: {}]
  %s2 = inlined_call_operand.vmem [shape: f32[1,128], index: 2, kind: input, shape index: {}]
  %s3 = inlined_call_operand.vmem [shape: f32[8,128], index: 3, kind: output, shape index: {}]
  %s4 = sld [smem:[#allocation0]]
  $region26: #{torch_rnn_forward.1} parent=0
    _
  %s6 = ssub.s32 1, %s4
  %s7 = scalar_select 0, %s6, %s4
  $region1: #{torch_rnn_forward.1} parent=0
    #allocation2 [shape = 'u8[98304]{0}', space=vmem, size = 0x18000, scoped, tag = 'input window, operand 1, single buffered']
    #allocation3 [shape = 's32[1]{0}', space=sflag, size = 0x4, scoped, tag = 'scoped memory for torch_rnn_forward.1']
    %8 = vsyncpa [#allocation3], 0
    // Predicated region
    $region2: #{torch_rnn_forward.1} parent=1 // pred_check
      _
    $region3: #{torch_rnn_forward.1} parent=1 // pred_check_branch
      %10 = sbr.rel (0) target = $region5
    $region4: #{torch_rnn_forward.1} parent=1 // pred_region
      _
    $region5: #{torch_rnn_forward.1} parent=1 // pred_fallthru
      _
    // Predicated region
    $region6: #{torch_rnn_forward.1} parent=1 // pred_check
      _
    $region7: #{torch_rnn_forward.1} parent=1 // pred_check_branch
      %12 = sbr.rel (0) target = $region9
    $region8: #{torch_rnn_forward.1} parent=1 // pred_region
      %14 = vsyncadd [#allocation3], 0
      %s15 = sshll.u32 %s1, 4
      %s16 = int_to_ptr.hbm [resolvable:$true] %s15
      %s17 = sshll.u32 [#allocation2], 4
      %s18 = int_to_ptr.vmem [resolvable:$true] %s17
      %23 = dma.hbm_to_vmem [thread:$0]  %s16, 3072, %s18, [#allocation3], 192, 192, 12
    $region9: #{torch_rnn_forward.1} parent=1 // pred_fallthru
      _
    // Predicated region
    $region10: #{torch_rnn_forward.1} parent=1 // pred_check
      _
    $region11: #{torch_rnn_forward.1} parent=1 // pred_check_branch
      %25 = sbr.rel (0) target = $region13
    $region12: #{torch_rnn_forward.1} parent=1 // pred_region
      _
    $region13: #{torch_rnn_forward.1} parent=1 // pred_fallthru
      _
    // Predicated region
    $region14: #{torch_rnn_forward.1} parent=1 // pred_check
      _
    $region15: #{torch_rnn_forward.1} parent=1 // pred_check_branch
      %27 = sbr.rel (0) target = $region17
    $region16: #{torch_rnn_forward.1} parent=1 // pred_region
      %29 = dma.done [#allocation3], 3072
    $region17: #{torch_rnn_forward.1} parent=1 // pred_fallthru
      _
    %v31 = vld [vmem:[#allocation2] sm:$0xf]
    %v32 = vld [vmem:[#allocation2 + $0xc] sm:$0xf]
    %v33 = vld [vmem:[#allocation2 + $0x18] sm:$0xf]
    %v34 = vld [vmem:[#allocation2 + $0x24] sm:$0xf]
    %v35 = vld [vmem:[#allocation2 + $0x30] sm:$0xf]
    %v36 = vld [vmem:[#allocation2 + $0x3c] sm:$0xf]
    %v37 = vld [vmem:[#allocation2 + $0x48] sm:$0xf]
    %v38 = vld [vmem:[#allocation2 + $0x54] sm:$0xf]
    %v39 = vld [vmem:[#allocation2 + $0x60] sm:$0xf]
    %v40 = vld [vmem:[#allocation2 + $0x6c] sm:$0xf]
    %v41 = vld [vmem:[#allocation2 + $0x78] sm:$0xf]
    %v42 = vld [vmem:[#allocation2 + $0x84] sm:$0xf]
    %v43 = vld [vmem:[#allocation2 + $0x90] sm:$0xf]
    %v44 = vld [vmem:[#allocation2 + $0x9c] sm:$0xf]
    %v45 = vld [vmem:[#allocation2 + $0xa8] sm:$0xf]
    %v46 = vld [vmem:[#allocation2 + $0xb4] sm:$0xf]
    %v47 = vld [vmem:[#allocation2 + $0x4] sm:$0xf]
    %v48 = vld [vmem:[#allocation2 + $0x10] sm:$0xf]
    %v49 = vld [vmem:[#allocation2 + $0x1c] sm:$0xf]
    %v50 = vld [vmem:[#allocation2 + $0x28] sm:$0xf]
    %v51 = vld [vmem:[#allocation2 + $0x34] sm:$0xf]
    %v52 = vld [vmem:[#allocation2 + $0x40] sm:$0xf]
    %v53 = vld [vmem:[#allocation2 + $0x4c] sm:$0xf]
    %v54 = vld [vmem:[#allocation2 + $0x58] sm:$0xf]
    %v55 = vld [vmem:[#allocation2 + $0x64] sm:$0xf]
    %v56 = vld [vmem:[#allocation2 + $0x70] sm:$0xf]
    %v57 = vld [vmem:[#allocation2 + $0x7c] sm:$0xf]
    %v58 = vld [vmem:[#allocation2 + $0x88] sm:$0xf]
    %v59 = vld [vmem:[#allocation2 + $0x94] sm:$0xf]
    %v60 = vld [vmem:[#allocation2 + $0xa0] sm:$0xf]
    %v61 = vld [vmem:[#allocation2 + $0xac] sm:$0xf]
    %v62 = vld [vmem:[#allocation2 + $0xb8] sm:$0xf]
    %v63 = vld [vmem:[#allocation2 + $0x8] sm:$0xf]
    %v64 = vld [vmem:[#allocation2 + $0x14] sm:$0xf]
    %v65 = vld [vmem:[#allocation2 + $0x20] sm:$0xf]
    %v66 = vld [vmem:[#allocation2 + $0x2c] sm:$0xf]
    %v67 = vld [vmem:[#allocation2 + $0x38] sm:$0xf]
    %v68 = vld [vmem:[#allocation2 + $0x44] sm:$0xf]
    %v69 = vld [vmem:[#allocation2 + $0x50] sm:$0xf]
    %v70 = vld [vmem:[#allocation2 + $0x5c] sm:$0xf]
    %v71 = vld [vmem:[#allocation2 + $0x68] sm:$0xf]
    %v72 = vld [vmem:[#allocation2 + $0x74] sm:$0xf]
    %v73 = vld [vmem:[#allocation2 + $0x80] sm:$0xf]
    %v74 = vld [vmem:[#allocation2 + $0x8c] sm:$0xf]
    %v75 = vld [vmem:[#allocation2 + $0x98] sm:$0xf]
    %v76 = vld [vmem:[#allocation2 + $0xa4] sm:$0xf]
    %v77 = vld [vmem:[#allocation2 + $0xb0] sm:$0xf]
    %v78 = vld [vmem:[#allocation2 + $0xbc] sm:$0xf]
    %v79 = vld [vmem:[%s0] sm:$0xff]
    %v80 = vld [vmem:[%s0 + $0x8] sm:$0xff]
    %v81 = vld [vmem:[%s0 + $0x10] sm:$0xff]
    %v82 = vld [vmem:[%s0 + $0x18] sm:$0xff]
    %v83 = vld [vmem:[%s0 + $0x20] sm:$0xff]
    %v84 = vld [vmem:[%s0 + $0x28] sm:$0xff]
    %v85 = vld [vmem:[%s0 + $0x30] sm:$0xff]
    %v86 = vld [vmem:[%s0 + $0x38] sm:$0xff]
    %v87 = vlaneseq
    %v88 = vand.u32 %v87, 127
    %89 = vset.pattern.permute.xlu0 0
    %90 = vperm.xlu0 %89, %v79
    %v91 = vpop.permute.xlu0 %90
    %92 = vset.pattern.permute.xlu0 0
    %93 = vperm.xlu0 %92, %v80
    %v94 = vpop.permute.xlu0 %93
    %95 = vset.pattern.permute.xlu0 0
    %96 = vperm.xlu0 %95, %v81
    %v97 = vpop.permute.xlu0 %96
    %98 = vset.pattern.permute.xlu0 0
    %99 = vperm.xlu0 %98, %v82
    %v100 = vpop.permute.xlu0 %99
    %101 = vset.pattern.permute.xlu0 0
    %102 = vperm.xlu0 %101, %v83
    %v103 = vpop.permute.xlu0 %102
    %104 = vset.pattern.permute.xlu0 0
    %105 = vperm.xlu0 %104, %v84
    %v106 = vpop.permute.xlu0 %105
    %107 = vset.pattern.permute.xlu0 0
    %108 = vperm.xlu0 %107, %v85
    %v109 = vpop.permute.xlu0 %108
    %110 = vset.pattern.permute.xlu0 0
    %111 = vperm.xlu0 %110, %v86
    %v112 = vpop.permute.xlu0 %111
    %vm113 = vcmp.eq.s32.totalorder %v88, %v91
    %vm114 = vcmp.eq.s32.totalorder %v88, %v94
    %vm115 = vcmp.eq.s32.totalorder %v88, %v97
    %vm116 = vcmp.eq.s32.totalorder %v88, %v100
    %vm117 = vcmp.eq.s32.totalorder %v88, %v103
    %vm118 = vcmp.eq.s32.totalorder %v88, %v106
    %vm119 = vcmp.eq.s32.totalorder %v88, %v109
    %vm120 = vcmp.eq.s32.totalorder %v88, %v112
    %v121 = vsel %vm113, 1.0, 0.0
    %v122 = vsel %vm114, 1.0, 0.0
    %v123 = vsel %vm115, 1.0, 0.0
    %v124 = vsel %vm116, 1.0, 0.0
    %v125 = vsel %vm117, 1.0, 0.0
    %v126 = vsel %vm118, 1.0, 0.0
    %v127 = vsel %vm119, 1.0, 0.0
    %v128 = vsel %vm120, 1.0, 0.0
    %v129 = vpack.c.bf16 %v122, %v121
    %v130 = vpack.c.bf16 %v124, %v123
    %v131 = vpack.c.bf16 %v126, %v125
    %v132 = vpack.c.bf16 %v128, %v127
    %v149 = vunpack.c.l.b16 %v31
    %v150 = vunpack.c.l.b16 %v32
    %v151 = vunpack.c.l.b16 %v33
    %v152 = vunpack.c.l.b16 %v34
    %v153 = vunpack.c.l.b16 %v35
    %v154 = vunpack.c.l.b16 %v36
    %v155 = vunpack.c.l.b16 %v37
    %v156 = vunpack.c.l.b16 %v38
    %v157 = vunpack.c.l.b16 %v39
    %v158 = vunpack.c.l.b16 %v40
    %v159 = vunpack.c.l.b16 %v41
    %v160 = vunpack.c.l.b16 %v42
    %v161 = vunpack.c.l.b16 %v43
    %v162 = vunpack.c.l.b16 %v44
    %v163 = vunpack.c.l.b16 %v45
    %v164 = vunpack.c.l.b16 %v46
    %v165 = vpack.c.b16 %v150, %v149
    %v166 = vpack.c.b16 %v152, %v151
    %v167 = vpack.c.b16 %v154, %v153
    %v168 = vpack.c.b16 %v156, %v155
    %v169 = vpack.c.b16 %v158, %v157
    %v170 = vpack.c.b16 %v160, %v159
    %v171 = vpack.c.b16 %v162, %v161
    %v172 = vpack.c.b16 %v164, %v163
    %181 = vmatpush.bf16.msra.mxu0 %v172
    %182 = vmatpush.bf16.msra.mxu0 %v171
    %183 = vmatpush.bf16.msra.mxu0 %v170
    %184 = vmatpush.bf16.msra.mxu0 %v169
    %185 = vmatpush.bf16.msra.mxu0 %v168
    %186 = vmatpush.bf16.msra.mxu0 %v167
    %187 = vmatpush.bf16.msra.mxu0 %v166
    %188 = vmatpush.bf16.msra.mxu0 %v165
    %189 = vmatmul.bf16.gmra.mxu0 %v129
    %v190 = vpop.f32.mrf.mxu0
    %v191 = vadd.f32 0.0, %v190
    %v192 = vpop.f32.mrf.mxu0
    %v193 = vadd.f32 0.0, %v192
    %194 = vmatmul.bf16.gmra.mxu0 %v130
    %v195 = vpop.f32.mrf.mxu0
    %v196 = vadd.f32 0.0, %v195
    %v197 = vpop.f32.mrf.mxu0
    %v198 = vadd.f32 0.0, %v197
    %199 = vmatmul.bf16.gmra.mxu0 %v131
    %v200 = vpop.f32.mrf.mxu0
    %v201 = vadd.f32 0.0, %v200
    %v202 = vpop.f32.mrf.mxu0
    %v203 = vadd.f32 0.0, %v202
    %204 = vmatmul.bf16.gmra.mxu0 %v132
    %v205 = vpop.f32.mrf.mxu0
    %v206 = vadd.f32 0.0, %v205
    %v207 = vpop.f32.mrf.mxu0
    %v208 = vadd.f32 0.0, %v207
    %209 = vdwg.mxu0
    %v226 = vunpack.c.l.b16 %v47
    %v227 = vunpack.c.l.b16 %v48
    %v228 = vunpack.c.l.b16 %v49
    %v229 = vunpack.c.l.b16 %v50
    %v230 = vunpack.c.l.b16 %v51
    %v231 = vunpack.c.l.b16 %v52
    %v232 = vunpack.c.l.b16 %v53
    %v233 = vunpack.c.l.b16 %v54
    %v234 = vunpack.c.l.b16 %v55
    %v235 = vunpack.c.l.b16 %v56
    %v236 = vunpack.c.l.b16 %v57
    %v237 = vunpack.c.l.b16 %v58
    %v238 = vunpack.c.l.b16 %v59
    %v239 = vunpack.c.l.b16 %v60
    %v240 = vunpack.c.l.b16 %v61
    %v241 = vunpack.c.l.b16 %v62
    %v242 = vpack.c.b16 %v227, %v226
    %v243 = vpack.c.b16 %v229, %v228
    %v244 = vpack.c.b16 %v231, %v230
    %v245 = vpack.c.b16 %v233, %v232
    %v246 = vpack.c.b16 %v235, %v234
    %v247 = vpack.c.b16 %v237, %v236
    %v248 = vpack.c.b16 %v239, %v238
    %v249 = vpack.c.b16 %v241, %v240
    %258 = vmatpush.bf16.msra.mxu0 %v249
    %259 = vmatpush.bf16.msra.mxu0 %v248
    %260 = vmatpush.bf16.msra.mxu0 %v247
    %261 = vmatpush.bf16.msra.mxu0 %v246
    %262 = vmatpush.bf16.msra.mxu0 %v245
    %263 = vmatpush.bf16.msra.mxu0 %v244
    %264 = vmatpush.bf16.msra.mxu0 %v243
    %265 = vmatpush.bf16.msra.mxu0 %v242
    %266 = vmatmul.bf16.gmra.mxu0 0
    %v267 = vpop.f32.mrf.mxu0
    %v268 = vadd.f32 0.0, %v267
    %v269 = vpop.f32.mrf.mxu0
    %270 = vdwg.mxu0
    %v271 = vadd.f32 %v191, %v268
    %v272 = vtanh.pop %v271
    %v273 = vpack.c.bf16 %v272, %v272
    %274 = vmatpush.bf16.msra.mxu0 %v249
    %275 = vmatpush.bf16.msra.mxu0 %v248
    %276 = vmatpush.bf16.msra.mxu0 %v247
    %277 = vmatpush.bf16.msra.mxu0 %v246
    %278 = vmatpush.bf16.msra.mxu0 %v245
    %279 = vmatpush.bf16.msra.mxu0 %v244
    %280 = vmatpush.bf16.msra.mxu0 %v243
    %281 = vmatpush.bf16.msra.mxu0 %v242
    %282 = vmatmul.bf16.gmra.mxu0 %v273
    %v283 = vpop.f32.mrf.mxu0
    %v284 = vadd.f32 0.0, %v283
    %v285 = vpop.f32.mrf.mxu0
    %286 = vdwg.mxu0
    %v287 = vadd.f32 %v193, %v284
    %v288 = vtanh.pop %v287
    %v289 = vpack.c.bf16 %v288, %v288
    %290 = vmatpush.bf16.msra.mxu0 %v249
    %291 = vmatpush.bf16.msra.mxu0 %v248
    %292 = vmatpush.bf16.msra.mxu0 %v247
    %293 = vmatpush.bf16.msra.mxu0 %v246
    %294 = vmatpush.bf16.msra.mxu0 %v245
    %295 = vmatpush.bf16.msra.mxu0 %v244
    %296 = vmatpush.bf16.msra.mxu0 %v243
    %297 = vmatpush.bf16.msra.mxu0 %v242
    %298 = vmatmul.bf16.gmra.mxu0 %v289
    %v299 = vpop.f32.mrf.mxu0
    %v300 = vadd.f32 0.0, %v299
    %v301 = vpop.f32.mrf.mxu0
    %302 = vdwg.mxu0
    %v303 = vadd.f32 %v196, %v300
    %v304 = vtanh.pop %v303
    %v305 = vpack.c.bf16 %v304, %v304
    %306 = vmatpush.bf16.msra.mxu0 %v249
    %307 = vmatpush.bf16.msra.mxu0 %v248
    %308 = vmatpush.bf16.msra.mxu0 %v247
    %309 = vmatpush.bf16.msra.mxu0 %v246
    %310 = vmatpush.bf16.msra.mxu0 %v245
    %311 = vmatpush.bf16.msra.mxu0 %v244
    %312 = vmatpush.bf16.msra.mxu0 %v243
    %313 = vmatpush.bf16.msra.mxu0 %v242
    %314 = vmatmul.bf16.gmra.mxu0 %v305
    %v315 = vpop.f32.mrf.mxu0
    %v316 = vadd.f32 0.0, %v315
    %v317 = vpop.f32.mrf.mxu0
    %318 = vdwg.mxu0
    %v319 = vadd.f32 %v198, %v316
    %v320 = vtanh.pop %v319
    %v321 = vpack.c.bf16 %v320, %v320
    %322 = vmatpush.bf16.msra.mxu0 %v249
    %323 = vmatpush.bf16.msra.mxu0 %v248
    %324 = vmatpush.bf16.msra.mxu0 %v247
    %325 = vmatpush.bf16.msra.mxu0 %v246
    %326 = vmatpush.bf16.msra.mxu0 %v245
    %327 = vmatpush.bf16.msra.mxu0 %v244
    %328 = vmatpush.bf16.msra.mxu0 %v243
    %329 = vmatpush.bf16.msra.mxu0 %v242
    %330 = vmatmul.bf16.gmra.mxu0 %v321
    %v331 = vpop.f32.mrf.mxu0
    %v332 = vadd.f32 0.0, %v331
    %v333 = vpop.f32.mrf.mxu0
    %334 = vdwg.mxu0
    %v335 = vadd.f32 %v201, %v332
    %v336 = vtanh.pop %v335
    %v337 = vpack.c.bf16 %v336, %v336
    %338 = vmatpush.bf16.msra.mxu0 %v249
    %339 = vmatpush.bf16.msra.mxu0 %v248
    %340 = vmatpush.bf16.msra.mxu0 %v247
    %341 = vmatpush.bf16.msra.mxu0 %v246
    %342 = vmatpush.bf16.msra.mxu0 %v245
    %343 = vmatpush.bf16.msra.mxu0 %v244
    %344 = vmatpush.bf16.msra.mxu0 %v243
    %345 = vmatpush.bf16.msra.mxu0 %v242
    %346 = vmatmul.bf16.gmra.mxu0 %v337
    %v347 = vpop.f32.mrf.mxu0
    %v348 = vadd.f32 0.0, %v347
    %v349 = vpop.f32.mrf.mxu0
    %350 = vdwg.mxu0
    %v351 = vadd.f32 %v203, %v348
    %v352 = vtanh.pop %v351
    %v353 = vpack.c.bf16 %v352, %v352
    %354 = vmatpush.bf16.msra.mxu0 %v249
    %355 = vmatpush.bf16.msra.mxu0 %v248
    %356 = vmatpush.bf16.msra.mxu0 %v247
    %357 = vmatpush.bf16.msra.mxu0 %v246
    %358 = vmatpush.bf16.msra.mxu0 %v245
    %359 = vmatpush.bf16.msra.mxu0 %v244
    %360 = vmatpush.bf16.msra.mxu0 %v243
    %361 = vmatpush.bf16.msra.mxu0 %v242
    %362 = vmatmul.bf16.gmra.mxu0 %v353
    %v363 = vpop.f32.mrf.mxu0
    %v364 = vadd.f32 0.0, %v363
    %v365 = vpop.f32.mrf.mxu0
    %366 = vdwg.mxu0
    %v367 = vadd.f32 %v206, %v364
    %v368 = vtanh.pop %v367
    %v369 = vpack.c.bf16 %v368, %v368
    %370 = vmatpush.bf16.msra.mxu0 %v249
    %371 = vmatpush.bf16.msra.mxu0 %v248
    %372 = vmatpush.bf16.msra.mxu0 %v247
    %373 = vmatpush.bf16.msra.mxu0 %v246
    %374 = vmatpush.bf16.msra.mxu0 %v245
    %375 = vmatpush.bf16.msra.mxu0 %v244
    %376 = vmatpush.bf16.msra.mxu0 %v243
    %377 = vmatpush.bf16.msra.mxu0 %v242
    %378 = vmatmul.bf16.gmra.mxu0 %v369
    %v379 = vpop.f32.mrf.mxu0
    %v380 = vadd.f32 0.0, %v379
    %v381 = vpop.f32.mrf.mxu0
    %382 = vdwg.mxu0
    %v383 = vadd.f32 %v208, %v380
    %v384 = vtanh.pop %v383
    %v385 = vpack.c.bf16 %v384, %v384
    %v386 = vld [vmem:[%s2] sm:$0x1]
    %v388 = vperm.slane %v386, 0
    %v406 = vunpack.c.l.b16 %v63
    %v407 = vunpack.c.l.b16 %v64
    %v408 = vunpack.c.l.b16 %v65
    %v409 = vunpack.c.l.b16 %v66
    %v410 = vunpack.c.l.b16 %v67
    %v411 = vunpack.c.l.b16 %v68
    %v412 = vunpack.c.l.b16 %v69
    %v413 = vunpack.c.l.b16 %v70
    %v414 = vunpack.c.l.b16 %v71
    %v415 = vunpack.c.l.b16 %v72
    %v416 = vunpack.c.l.b16 %v73
    %v417 = vunpack.c.l.b16 %v74
    %v418 = vunpack.c.l.b16 %v75
    %v419 = vunpack.c.l.b16 %v76
    %v420 = vunpack.c.l.b16 %v77
    %v421 = vunpack.c.l.b16 %v78
    %v422 = vpack.c.b16 %v407, %v406
    %v423 = vpack.c.b16 %v409, %v408
    %v424 = vpack.c.b16 %v411, %v410
    %v425 = vpack.c.b16 %v413, %v412
    %v426 = vpack.c.b16 %v415, %v414
    %v427 = vpack.c.b16 %v417, %v416
    %v428 = vpack.c.b16 %v419, %v418
    %v429 = vpack.c.b16 %v421, %v420
    %438 = vmatpush.bf16.msra.mxu0 %v429
    %439 = vmatpush.bf16.msra.mxu0 %v428
    %440 = vmatpush.bf16.msra.mxu0 %v427
    %441 = vmatpush.bf16.msra.mxu0 %v426
    %442 = vmatpush.bf16.msra.mxu0 %v425
    %443 = vmatpush.bf16.msra.mxu0 %v424
    %444 = vmatpush.bf16.msra.mxu0 %v423
    %445 = vmatpush.bf16.msra.mxu0 %v422
    %446 = vmatmul.bf16.gmra.mxu0 %v385
    %v447 = vpop.f32.mrf.mxu0
    %v448 = vadd.f32 %v388, %v447
    %v449 = vpop.f32.mrf.mxu0
    %450 = vdwg.mxu0
    %451 = vst [vmem:[%s3] sm:$0xff] %v448
    // Predicated region
    $region18: #{torch_rnn_forward.1} parent=1 // pred_check
      _
    $region19: #{torch_rnn_forward.1} parent=1 // pred_check_branch
      %453 = sbr.rel (0) target = $region21
    $region20: #{torch_rnn_forward.1} parent=1 // pred_region
      _
    $region21: #{torch_rnn_forward.1} parent=1 // pred_fallthru
      _
    // Predicated region
    $region22: #{torch_rnn_forward.1} parent=1 // pred_check
      _
    $region23: #{torch_rnn_forward.1} parent=1 // pred_check_branch
      %455 = sbr.rel (0) target = $region25
    $region24: #{torch_rnn_forward.1} parent=1 // pred_region
      _
    $region25: #{torch_rnn_forward.1} parent=1 // pred_fallthru
      _
    %456 = vsyncpa [#allocation3], 1

</llo_original>
